<compile_context>
chip_gen: v7x
topology: tpu7x:2x2x1
jax: 0.10.0
libtpu: 0.0.40
codegen_flags: <defaults>
</compile_context>

<pallas_src>
import numpy as np
import jax
import jax.numpy as jnp
from jax.experimental import pallas as pl
from jax.experimental.pallas import tpu as pltpu


# ---------------------------------------------------------------------------
# Kernel: one (batch, spatial-tile) block per grid step.
# ---------------------------------------------------------------------------
def _noise_injection_kernel(x_ref, noise_ref, w_ref, out_ref):
    # x_ref:     (1, C, T)  image tile (native dtype), VMEM
    # noise_ref: (1, 1, T)  noise tile (image dtype), broadcast over C, VMEM
    # w_ref:     (1,)       scalar weight, SMEM (scalar path)
    w = w_ref[0]
    x = x_ref[...].astype(jnp.float32)
    n = noise_ref[...].astype(jnp.float32)
    out_ref[...] = (x + w * n).astype(out_ref.dtype)


def _round_up(x, m):
    return ((x + m - 1) // m) * m


def _pick_tile_hw(hw_pad, c, itemsize, batch):
    """Lane-dense spatial tile sized by total double-buffered VMEM footprint."""
    # Sublane packing: 8 rows of 32-bit; sub-32-bit dtypes pack 2x / 4x rows.
    sub = 8 * max(1, 4 // itemsize)            # 8 (f32) / 16 (bf16) / 32 (int8)
    c_pad = _round_up(c, sub)                  # padded sublane extent of image tile
    n_pad = sub                                # noise's single row pads to a full tile row
    # Total footprint target: 2 buffers each of (x-in + out + noise) blocks.
    # 24 MiB fits v7x's 64 MiB VMEM (with headroom) and saturates HBM on
    # v5e / v6e as well.
    budget_total = 24 * 1024 * 1024
    bytes_per_lane = (2 * c_pad + n_pad) * itemsize
    t = budget_total // (2 * bytes_per_lane)
    t = max(128, (t // 128) * 128)             # multiple of 128 -> unmasked vst
    t = min(t, hw_pad)
    # Keep >= 4 total grid steps when possible so both v7x TensorCores get work.
    want_tiles = (4 + batch - 1) // batch
    if want_tiles > 1:
        t_cap = max(128, ((hw_pad // want_tiles) // 128) * 128)
        t = min(t, t_cap)
    return t


# ---------------------------------------------------------------------------
# Parameter init (mirrors PyTorch: self.weight = nn.Parameter(torch.zeros(1)))
# ---------------------------------------------------------------------------
def init_noise_injection_params():
    return {"weight": jnp.zeros((1,), jnp.float32)}


# ---------------------------------------------------------------------------
# Wrapper
# ---------------------------------------------------------------------------
def noise_injection(image, weight, noise=None, *, key=None):
    B, C, H, W = image.shape
    HW = H * W
    dtype = image.dtype
    itemsize = jnp.dtype(dtype).itemsize

    if noise is None:
        # PyTorch: image.new_empty(B, 1, H, W).normal_()  -> drawn in image dtype.
        # TODO(synk): generate the Gaussian in-kernel (pltpu.prng_seed +
        # pltpu.prng_random_bits / stateful_normal) to skip this (B,1,H,W)
        # HBM round trip entirely.
        if key is None:
            key = jax.random.PRNGKey(0)
        noise = jax.random.normal(key, (B, 1, H, W), dtype=dtype)
    else:
        # Stream noise in the image dtype (halves noise bytes when image is
        # bf16); accumulation is f32 in-kernel so precision loss is negligible.
        noise = noise.astype(dtype)

    x_flat = image.reshape(B, C, HW)
    n_flat = noise.reshape(B, 1, HW)

    # Pad the spatial axis to a lane multiple so every block is lane-dense and
    # VMEM-bounded (no single giant block for odd resolutions).
    hw_pad = _round_up(HW, 128)
    if hw_pad != HW:
        pad = hw_pad - HW
        x_flat = jnp.pad(x_flat, ((0, 0), (0, 0), (0, pad)))
        n_flat = jnp.pad(n_flat, ((0, 0), (0, 0), (0, pad)))

    w = jnp.asarray(weight, jnp.float32).reshape(1)

    tile = _pick_tile_hw(hw_pad, C, itemsize, B)
    grid = (B, pl.cdiv(hw_pad, tile))

    cost = pl.CostEstimate(
        flops=2 * B * C * HW,
        transcendentals=0,
        bytes_accessed=(2 * B * C * hw_pad + B * hw_pad) * itemsize,
    )

    out = pl.pallas_call(
        _noise_injection_kernel,
        out_shape=jax.ShapeDtypeStruct((B, C, hw_pad), dtype),
        grid=grid,
        in_specs=[
            pl.BlockSpec((1, C, tile), lambda b, t: (b, 0, t)),
            pl.BlockSpec((1, 1, tile), lambda b, t: (b, 0, t)),
            pl.BlockSpec(memory_space=pltpu.MemorySpace.SMEM),
        ],
        out_specs=pl.BlockSpec((1, C, tile), lambda b, t: (b, 0, t)),
        compiler_params=pltpu.CompilerParams(
            dimension_semantics=("parallel", "parallel"),
            vmem_limit_bytes=48 << 20,
        ),
        cost_estimate=cost,
    )(x_flat, n_flat, w)

    if hw_pad != HW:
        out = out[:, :, :HW]
    return out.reshape(B, C, H, W)


# ---------------------------------------------------------------------------
# Pure-JAX reference for verification
# ---------------------------------------------------------------------------
def noise_injection_ref(image, weight, noise):
    w = jnp.asarray(weight, jnp.float32).reshape(())
    return (image.astype(jnp.float32)
            + w * noise.astype(jnp.float32)).astype(image.dtype)


if __name__ == "__main__":
    key = jax.random.PRNGKey(0)
    B, C, H, W = 2, 4, 16, 16
    k1, k2, k3 = jax.random.split(key, 3)

    image = jax.random.normal(k1, (B, C, H, W), jnp.float32)
    noise = jax.random.normal(k2, (B, 1, H, W), jnp.float32)

    # --- explicit noise, non-zero weight (exercises broadcast + scale) ---
    weight = jnp.asarray([0.7], jnp.float32)
    out = noise_injection(image, weight, noise=noise)
    jax.block_until_ready(out)
    ref = noise_injection_ref(image, weight, noise)
    assert out.shape == (B, C, H, W)
    np.testing.assert_allclose(np.asarray(out), np.asarray(ref),
                               rtol=1e-6, atol=1e-6)

    # --- default (zeros) weight: out must equal image exactly ---
    params = init_noise_injection_params()
    out0 = noise_injection(image, params["weight"], noise=noise)
    jax.block_until_ready(out0)
    np.testing.assert_allclose(np.asarray(out0), np.asarray(image),
                               rtol=0, atol=0)

    # --- noise=None path (fresh noise in image dtype, wrapper-generated) ---
    out_rand = noise_injection(image, weight, noise=None, key=k3)
    jax.block_until_ready(out_rand)
    assert out_rand.shape == (B, C, H, W)
    assert np.all(np.isfinite(np.asarray(out_rand)))

    # --- bf16 inputs: bf16 streaming, f32 accumulate, bf16 output ---
    image_bf = image.astype(jnp.bfloat16)
    noise_bf = noise.astype(jnp.bfloat16)
    out_bf = noise_injection(image_bf, weight, noise=noise_bf)
    jax.block_until_ready(out_bf)
    ref_bf = noise_injection_ref(image_bf, weight, noise_bf)
    np.testing.assert_allclose(np.asarray(out_bf, np.float32),
                               np.asarray(ref_bf, np.float32),
                               rtol=2e-2, atol=2e-2)

    # --- non-128-multiple resolution (4x4): exercises the lane-padding path ---
    img_small = jax.random.normal(k2, (B, C, 4, 4), jnp.float32)
    noi_small = jax.random.normal(k3, (B, 1, 4, 4), jnp.float32)
    out_small = noise_injection(img_small, weight, noise=noi_small)
    jax.block_until_ready(out_small)
    ref_small = noise_injection_ref(img_small, weight, noi_small)
    np.testing.assert_allclose(np.asarray(out_small), np.asarray(ref_small),
                               rtol=1e-6, atol=1e-6)

    print("KERNEL_OK")
</pallas_src>

<mosaic_0001>
module attributes {stable_mosaic.version = 11 : i64} {
  func.func @_noise_injection_kernel(%arg0: i32, %arg1: i32, %arg2: memref<1x4x128xf32, #tpu.memory_space<vmem>>, %arg3: memref<1x1x128xf32, #tpu.memory_space<vmem>>, %arg4: memref<1xf32, #tpu.memory_space<smem>>, %arg5: memref<1x4x128xf32, #tpu.memory_space<vmem>>) attributes {dimension_semantics = [#tpu.dimension_semantics<parallel>, #tpu.dimension_semantics<parallel>], iteration_bounds = array<i64: 2, 2>, scalar_prefetch = 0 : i64, scratch_operands = 0 : i64, tpu.core_type = #tpu.core_type<tc>, window_params = [{transform_indices = @transform_0, window_bounds = array<i64: 1, 4, 128>}, {transform_indices = @transform_1, window_bounds = array<i64: 1, 1, 128>}, {transform_indices = @transform_2, window_bounds = array<i64: 1>}, {transform_indices = @transform_3, window_bounds = array<i64: 1, 4, 128>}]} {
    %c0 = arith.constant 0 : index
    %0 = memref.load %arg4[%c0] : memref<1xf32, #tpu.memory_space<smem>>
    %c0_0 = arith.constant 0 : index
    %c0_1 = arith.constant 0 : index
    %c0_2 = arith.constant 0 : index
    %1 = vector.load %arg2[%c0_0, %c0_1, %c0_2] : memref<1x4x128xf32, #tpu.memory_space<vmem>>, vector<1x4x128xf32>
    %c0_3 = arith.constant 0 : index
    %c0_4 = arith.constant 0 : index
    %c0_5 = arith.constant 0 : index
    %2 = vector.load %arg3[%c0_3, %c0_4, %c0_5] : memref<1x1x128xf32, #tpu.memory_space<vmem>>, vector<1x1x128xf32>
    %3 = vector.broadcast %0 : f32 to vector<1x1x128xf32>
    %4 = arith.mulf %3, %2 : vector<1x1x128xf32>
    %5 = vector.broadcast %4 : vector<1x1x128xf32> to vector<1x4x128xf32>
    %6 = arith.addf %1, %5 : vector<1x4x128xf32>
    %c0_6 = arith.constant 0 : index
    %c0_7 = arith.constant 0 : index
    %c0_8 = arith.constant 0 : index
    %7 = vector.load %arg5[%c0_6, %c0_7, %c0_8] : memref<1x4x128xf32, #tpu.memory_space<vmem>>, vector<1x4x128xf32>
    tpu.vector_store %arg5[%c0_6, %c0_7, %c0_8], %6 {strides = array<i32>} : memref<1x4x128xf32, #tpu.memory_space<vmem>>, vector<1x4x128xf32>,
    return
  }
  func.func @transform_0(%arg0: i32, %arg1: i32) -> (i32, i32, i32) {
    %c0_i32 = arith.constant 0 : i32
    %c0_i32_0 = arith.constant 0 : i32
    return %arg0, %c0_i32, %arg1 : i32, i32, i32
  }
  func.func @transform_1(%arg0: i32, %arg1: i32) -> (i32, i32, i32) {
    %c0_i32 = arith.constant 0 : i32
    %c0_i32_0 = arith.constant 0 : i32
    return %arg0, %c0_i32, %arg1 : i32, i32, i32
  }
  func.func @transform_2(%arg0: i32, %arg1: i32) -> i32 {
    %c0_i32 = arith.constant 0 : i32
    %c0_i32_0 = arith.constant 0 : i32
    return %c0_i32 : i32
  }
  func.func @transform_3(%arg0: i32, %arg1: i32) -> (i32, i32, i32) {
    %c0_i32 = arith.constant 0 : i32
    %c0_i32_0 = arith.constant 0 : i32
    return %arg0, %c0_i32, %arg1 : i32, i32, i32
  }
}

</mosaic_0001>

<llo_original>
// kernel: tpu_custom_call.1
$region0: #{tpu_custom_call.1}
  #allocation0 [shape = 'u32[]', space=smem, size = 0x4, offset = 0x4, fixed_abs, tag = 'smem constant byte address 0x4 - core index']
  #allocation1 [shape = 'u32[144,128]{1,0:T(1,128)}', space=vmem, size = 0x12000, scoped, tag = 'internal scratch']
  #allocation2 [shape = 'f32[1]{0:T(128)S(6)}', space=smem, size = 0x200, scoped, tag = 'scoped memory for tpu_custom_call.1']
  %s0 = inlined_call_operand.hbm [shape: f32[2,4,256], index: 0, kind: input, shape index: {}]
  %s1 = inlined_call_operand.vmem [shape: f32[2,1,256], index: 1, kind: input, shape index: {}]
  %s2 = inlined_call_operand.<no memory space> [shape: f32[1], index: 2, kind: input, shape index: {}]
  %s3 = inlined_call_operand.hbm [shape: f32[2,4,256], index: 3, kind: output, shape index: {}]
  %s4 = sld [smem:[#allocation0]]
  $region49: #{tpu_custom_call.1} parent=0
    _
  %s6 = ssub.s32 1, %s4
  %s7 = scalar_select 0, %s6, %s4
  %8 = sst [smem:[#allocation2]] %s2
  $region1: #{tpu_custom_call.1} parent=0
    #allocation3 [shape = 'u8[4096]{0}', space=vmem, size = 0x1000, scoped, tag = 'input window, operand 0']
    #allocation4 [shape = 's32[2]{0}', space=sflag, size = 0x8, scoped, tag = 'scoped memory for tpu_custom_call.1']
    #allocation5 [shape = 's32[2]{0}', space=sflag, size = 0x8, scoped, tag = 'scoped memory for tpu_custom_call.1']
    #allocation6 [shape = 'u8[4096]{0}', space=vmem, size = 0x1000, scoped, tag = 'output window, operand 0']
    %9 = vsyncpa [#allocation4], 0
    %s10 = scalar_lea.sflag [#allocation4], 1
    %11 = vsyncpa %s10, 0
    %12 = vsyncpa [#allocation5], 0
    %s13 = scalar_lea.sflag [#allocation5], 1
    %14 = vsyncpa %s13, 0
    loop: start=0, step=1, limit=6
    $region2: #{tpu_custom_call.1} parent=1 // loop_pre_header
      _
    $region3: #{tpu_custom_call.1} parent=1 // loop_header
      %s16 = sphi 0, %s20
      %p17 = scmp.ge.s32.totalorder %s16, 6
      %s23 = sphi 0, %s35
      %s24 = sphi 0, %s31
      %s25 = sphi 0, %s23
      %s26 = sphi 0, %s24
      %s27 = sphi 0, %s25
      %s28 = sphi 0, %s26
      %s40 = sphi 0, %s42
      %s43 = sphi 0, %s40
      %s44 = sphi 0, %s43
      %s60 = sphi 0, %s44
      %s68 = sphi 0, %s70
      %s71 = sphi 0, %s68
      %s72 = sphi 0, %s71
      %s88 = sphi 0, %s72
      %s92 = sphi 0, %s92
      %s94 = sphi 0, %s92
      %s95 = sphi 0, %s94
      %s109 = sphi 0, %s95
      %s117 = sphi 0, %s119
      %s120 = sphi 0, %s117
      %s121 = sphi 0, %s120
      %s137 = sphi 0, %s121
    $region4: #{tpu_custom_call.1} parent=1 // loop_header_branch
      %19 = sbr.rel (%p17) target = $region8
    $region5: #{tpu_custom_call.1} parent=1 // loop_body
      %s21 = ssub.s32 %s16, 1
      %s22 = ssub.s32 %s16, 2
      %s29 = sadd.s32 1, %s24
      %p30 = scmp.ge.s32.totalorder %s29, 2
      %s31 = scalar_select %p30, 0, %s29
      %s32 = sadd.s32 1, %s23
      %s33 = scalar_select %p30, %s32, %s23
      %p34 = scmp.ge.s32.totalorder %s33, 2
      %s35 = scalar_select %p34, 0, %s33
      %s36 = ssub.s32 %s23, %s35
      %s37 = ssub.s32 %s24, %s31
      %s38 = sor.u32 %s36, %s37
      %p39 = scmp.eq.s32.totalorder %s38, 0
      %s41 = sadd.s32 %s40, 1
      %s42 = scalar_select %p39, %s40, %s41
      %p45 = pneg %p39
      %p46 = scmp.eq.s32.totalorder %s16, 3
      %p47 = por %p45, %p46
      %p48 = scmp.ne.s32.totalorder %s40, %s43
      %p49 = scmp.eq.s32.totalorder %s16, 0
      %p50 = por %p48, %p49
      %p51 = scmp.ne.s32.totalorder %s40, %s43
      %p52 = scmp.eq.s32.totalorder %s21, 3
      %p53 = por %p51, %p52
      %p54 = scmp.ne.s32.totalorder %s43, %s44
      %p55 = scmp.eq.s32.totalorder %s21, 0
      %p56 = por %p54, %p55
      %p57 = scmp.ne.s32.totalorder %s43, %s44
      %p58 = scmp.eq.s32.totalorder %s22, 3
      %p59 = por %p57, %p58
      %p61 = scmp.ne.s32.totalorder %s44, %s60
      %p62 = scmp.eq.s32.totalorder %s22, 0
      %p63 = por %p61, %p62
      %s64 = ssub.s32 %s23, %s35
      %s65 = ssub.s32 %s24, %s31
      %s66 = sor.u32 %s64, %s65
      %p67 = scmp.eq.s32.totalorder %s66, 0
      %s69 = sadd.s32 %s68, 1
      %s70 = scalar_select %p67, %s68, %s69
      %p73 = pneg %p67
      %p74 = scmp.eq.s32.totalorder %s16, 3
      %p75 = por %p73, %p74
      %p76 = scmp.ne.s32.totalorder %s68, %s71
      %p77 = scmp.eq.s32.totalorder %s16, 0
      %p78 = por %p76, %p77
      %p79 = scmp.ne.s32.totalorder %s68, %s71
      %p80 = scmp.eq.s32.totalorder %s21, 3
      %p81 = por %p79, %p80
      %p82 = scmp.ne.s32.totalorder %s71, %s72
      %p83 = scmp.eq.s32.totalorder %s21, 0
      %p84 = por %p82, %p83
      %p85 = scmp.ne.s32.totalorder %s71, %s72
      %p86 = scmp.eq.s32.totalorder %s22, 3
      %p87 = por %p85, %p86
      %p89 = scmp.ne.s32.totalorder %s72, %s88
      %p90 = scmp.eq.s32.totalorder %s22, 0
      %p91 = por %p89, %p90
      %s93 = sadd.s32 %s92, 1
      %p96 = scmp.eq.s32.totalorder %s16, 3
      %p97 = scmp.ne.s32.totalorder %s92, %s94
      %p98 = scmp.eq.s32.totalorder %s16, 0
      %p99 = por %p97, %p98
      %p100 = scmp.ne.s32.totalorder %s92, %s94
      %p101 = scmp.eq.s32.totalorder %s21, 3
      %p102 = por %p100, %p101
      %p103 = scmp.ne.s32.totalorder %s94, %s95
      %p104 = scmp.eq.s32.totalorder %s21, 0
      %p105 = por %p103, %p104
      %p106 = scmp.ne.s32.totalorder %s94, %s95
      %p107 = scmp.eq.s32.totalorder %s22, 3
      %p108 = por %p106, %p107
      %p110 = scmp.ne.s32.totalorder %s95, %s109
      %p111 = scmp.eq.s32.totalorder %s22, 0
      %p112 = por %p110, %p111
      %s113 = ssub.s32 %s23, %s35
      %s114 = ssub.s32 %s24, %s31
      %s115 = sor.u32 %s113, %s114
      %p116 = scmp.eq.s32.totalorder %s115, 0
      %s118 = sadd.s32 %s117, 1
      %s119 = scalar_select %p116, %s117, %s118
      %p122 = pneg %p116
      %p123 = scmp.eq.s32.totalorder %s16, 3
      %p124 = por %p122, %p123
      %p125 = scmp.ne.s32.totalorder %s117, %s120
      %p126 = scmp.eq.s32.totalorder %s16, 0
      %p127 = por %p125, %p126
      %p128 = scmp.ne.s32.totalorder %s117, %s120
      %p129 = scmp.eq.s32.totalorder %s21, 3
      %p130 = por %p128, %p129
      %p131 = scmp.ne.s32.totalorder %s120, %s121
      %p132 = scmp.eq.s32.totalorder %s21, 0
      %p133 = por %p131, %p132
      %p134 = scmp.ne.s32.totalorder %s120, %s121
      %p135 = scmp.eq.s32.totalorder %s22, 3
      %p136 = por %p134, %p135
      %p138 = scmp.ne.s32.totalorder %s121, %s137
      %p139 = scmp.eq.s32.totalorder %s22, 0
      %p140 = por %p138, %p139
      %p141 = scmp.le.s32.totalorder 1, %s16
      %p142 = scmp.lt.s32.totalorder %s16, 5
      %p143 = pnand %p141, %p142
      %p144 = pneg %p143
      // Predicated region
      $region9: #{tpu_custom_call.1} parent=5 // pred_check
        _
      $region10: #{tpu_custom_call.1} parent=5 // pred_check_branch
        %146 = sbr.rel (%p143) target = $region12
      $region11: #{tpu_custom_call.1} parent=5 // pred_region
        %s147 = ssub.s32 %s16, 1
        // Predicated region
        $region13: #{tpu_custom_call.1} parent=11 // pred_check
          %p148 = pneg %p105
        $region14: #{tpu_custom_call.1} parent=11 // pred_check_branch
          %150 = sbr.rel (%p148) target = $region16
        $region15: #{tpu_custom_call.1} parent=11 // pred_region
          _
        $region16: #{tpu_custom_call.1} parent=11 // pred_fallthru
          _
      $region12: #{tpu_custom_call.1} parent=5 // pred_fallthru
        _
      %p151 = scmp.lt.s32.totalorder %s16, 4
      // Predicated region
      $region17: #{tpu_custom_call.1} parent=5 // pred_check
        %p152 = pneg %p151
      $region18: #{tpu_custom_call.1} parent=5 // pred_check_branch
        %154 = sbr.rel (%p152) target = $region20
      $region19: #{tpu_custom_call.1} parent=5 // pred_region
        // Predicated region
        $region21: #{tpu_custom_call.1} parent=19 // pred_check
          %p155 = pneg %p50
        $region22: #{tpu_custom_call.1} parent=19 // pred_check_branch
          %157 = sbr.rel (%p155) target = $region24
        $region23: #{tpu_custom_call.1} parent=19 // pred_region
          %s158 = sand.u32 %s40, 1
          %s159 = scalar_lea.sflag [#allocation4], %s158
          %s160 = sand.u32 %s40, 1
          %s161 = smul.addr %s160, 4
          %s162 = scalar_lea.vmem [#allocation3], %s161
          %s164 = ssub.s32 64, 64
          %165 = vsyncadd %s159, %s164
          %s166 = smul.addr %s23, 2
          %s167 = sadd.s32 %s24, %s166
          %s168 = smul.addr %s167, 64
          %s169 = scalar_lea.hbm %s0, %s168
          %s171 = sshll.u32 %s162, 4
          %s172 = int_to_ptr.vmem [resolvable:$true] %s171
          %174 = dma.hbm_to_vmem [thread:$0]  %s169, 64, %s172, %s159
        $region24: #{tpu_custom_call.1} parent=19 // pred_fallthru
          _
        // Predicated region
        $region25: #{tpu_custom_call.1} parent=19 // pred_check
          %p175 = pneg %p78
        $region26: #{tpu_custom_call.1} parent=19 // pred_check_branch
          %177 = sbr.rel (%p175) target = $region28
        $region27: #{tpu_custom_call.1} parent=19 // pred_region
          %p178 = scmp.lt.s32.totalorder %s23, 1
          %s179 = scalar_select %p178, %s23, 1
          %p180 = scmp.lt.s32.totalorder %s24, 1
          %s181 = scalar_select %p180, %s24, 1
          %s182 = smul.addr %s179, 2
          %s183 = sadd.s32 %s181, %s182
          %s184 = scalar_lea.vmem %s1, %s183
        $region28: #{tpu_custom_call.1} parent=19 // pred_fallthru
          _
      $region20: #{tpu_custom_call.1} parent=5 // pred_fallthru
        _
      %p185 = scmp.le.s32.totalorder 1, %s16
      %p186 = scmp.lt.s32.totalorder %s16, 5
      %p187 = pnand %p185, %p186
      %p188 = pneg %p187
      // Predicated region
      $region29: #{tpu_custom_call.1} parent=5 // pred_check
        _
      $region30: #{tpu_custom_call.1} parent=5 // pred_check_branch
        %190 = sbr.rel (%p187) target = $region32
      $region31: #{tpu_custom_call.1} parent=5 // pred_region
        %s191 = ssub.s32 %s16, 1
        %s192 = sand.u32 %s43, 1
        %s193 = scalar_lea.sflag [#allocation4], %s192
        %s194 = sand.u32 %s43, 1
        %s195 = smul.addr %s194, 4
        %s196 = scalar_lea.vmem [#allocation3], %s195
        // Predicated region
        $region33: #{tpu_custom_call.1} parent=31 // pred_check
          %p197 = pneg %p56
        $region34: #{tpu_custom_call.1} parent=31 // pred_check_branch
          %199 = sbr.rel (%p197) target = $region36
        $region35: #{tpu_custom_call.1} parent=31 // pred_region
          %200 = dma.done %s193, 64
        $region36: #{tpu_custom_call.1} parent=31 // pred_fallthru
          _
        %s201 = sand.u32 %s43, 1
        %s202 = scalar_lea.sflag [#allocation4], %s201
        %s203 = sand.u32 %s43, 1
        %s204 = smul.addr %s203, 4
        %s205 = scalar_lea.vmem [#allocation3], %s204
        %p206 = pneg %p56
        %p207 = pneg %p53
        %p208 = scmp.lt.s32.totalorder %s25, 1
        %s209 = scalar_select %p208, %s25, 1
        %p210 = scmp.lt.s32.totalorder %s26, 1
        %s211 = scalar_select %p210, %s26, 1
        %s212 = smul.addr %s209, 2
        %s213 = sadd.s32 %s211, %s212
        %s214 = scalar_lea.vmem %s1, %s213
        %p215 = pneg %p84
        %p216 = pneg %p81
        %p217 = pneg %p105
        %p218 = pneg %p102
        %p219 = pneg %p133
        %p220 = pneg %p130
        %s221 = sand.u32 %s120, 1
        %s222 = scalar_lea.sflag [#allocation5], %s221
        %s223 = sand.u32 %s120, 1
        %s224 = smul.addr %s223, 4
        %s225 = scalar_lea.vmem [#allocation6], %s224
        %p226 = scmp.lt.s32.totalorder %s25, 1
        %s227 = scalar_select %p226, %s25, 1
        %p228 = scmp.lt.s32.totalorder %s26, 1
        %s229 = scalar_select %p228, %s26, 1
        %s230 = smul.addr %s227, 2
        %s231 = sadd.s32 %s229, %s230
        %s232 = scalar_lea.vmem %s1, %s231
        %s233 = sld [smem:[#allocation2]]
        %v234 = vld [vmem:[%s196] sm:$0xf]
        %v235 = vld [vmem:[%s232] sm:$0x1]
        %v236 = vstv %s233
        %v237 = vmul.f32 %v236, %v235
        %v239 = vlaneseq
        %v240 = vshrl.u32 %v239, 7
        %v241 = vsub.s32 0, %v240
        %v242 = vrot.slane %v237, %v241
        %v244 = vadd.f32 %v234, %v242
        %245 = vst [vmem:[%s225] sm:$0xf] %v244
        %s246 = sand.u32 %s120, 1
        %s247 = scalar_lea.sflag [#allocation5], %s246
        %s248 = sand.u32 %s120, 1
        %s249 = smul.addr %s248, 4
        %s250 = scalar_lea.vmem [#allocation6], %s249
        // Predicated region
        $region37: #{tpu_custom_call.1} parent=31 // pred_check
          %p251 = pneg %p130
        $region38: #{tpu_custom_call.1} parent=31 // pred_check_branch
          %253 = sbr.rel (%p251) target = $region40
        $region39: #{tpu_custom_call.1} parent=31 // pred_region
          %s255 = ssub.s32 64, 64
          %256 = vsyncadd %s247, %s255
          %s257 = smul.addr %s25, 2
          %s258 = sadd.s32 %s26, %s257
          %s259 = smul.addr %s258, 64
          %s260 = scalar_lea.hbm %s3, %s259
          %s262 = sshll.u32 %s250, 4
          %s263 = int_to_ptr.vmem [resolvable:$true] %s262
          %265 = dma.vmem_to_hbm [thread:$0]  %s263, 64, %s260, %s247
        $region40: #{tpu_custom_call.1} parent=31 // pred_fallthru
          _
      $region32: #{tpu_custom_call.1} parent=5 // pred_fallthru
        _
      %p266 = scmp.le.s32.totalorder 2, %s16
      // Predicated region
      $region41: #{tpu_custom_call.1} parent=5 // pred_check
        %p267 = pneg %p266
      $region42: #{tpu_custom_call.1} parent=5 // pred_check_branch
        %269 = sbr.rel (%p267) target = $region44
      $region43: #{tpu_custom_call.1} parent=5 // pred_region
        %s270 = ssub.s32 %s16, 2
        // Predicated region
        $region45: #{tpu_custom_call.1} parent=43 // pred_check
          %p271 = pneg %p136
        $region46: #{tpu_custom_call.1} parent=43 // pred_check_branch
          %273 = sbr.rel (%p271) target = $region48
        $region47: #{tpu_custom_call.1} parent=43 // pred_region
          %s274 = sand.u32 %s121, 1
          %s275 = scalar_lea.sflag [#allocation5], %s274
          %s276 = sand.u32 %s121, 1
          %s277 = smul.addr %s276, 4
          %s278 = scalar_lea.vmem [#allocation6], %s277
          %279 = dma.done %s275, 64
        $region48: #{tpu_custom_call.1} parent=43 // pred_fallthru
          _
      $region44: #{tpu_custom_call.1} parent=5 // pred_fallthru
        _
    $region6: #{tpu_custom_call.1} parent=1 // loop_footer
      %s20 = sadd.s32 1, %s16
    $region7: #{tpu_custom_call.1} parent=1 // loop_footer_branch
      %15 = sbr.rel target = $region3
    $region8: #{tpu_custom_call.1} parent=1 // loop_exit
      _
    %280 = vsyncpa [#allocation4], 1
    %s281 = scalar_lea.sflag [#allocation4], 1
    %282 = vsyncpa %s281, 1
    %283 = vsyncpa [#allocation5], 1
    %s284 = scalar_lea.sflag [#allocation5], 1
    %285 = vsyncpa %s284, 1

</llo_original>
